<compile_context>
chip_gen: v7x
topology: tpu7x:2x2x1
jax: 0.10.0
libtpu: 0.0.40
codegen_flags: <defaults>
</compile_context>

<pallas_src>
import functools
import math

import numpy as np
import jax
import jax.numpy as jnp
from jax.experimental import pallas as pl
from jax.experimental.pallas import tpu as pltpu

BN_EPS = 1e-5
BN_SCALE = 1.0 / math.sqrt(1.0 + BN_EPS)   # eval-mode BN with default running stats
VMEM_LIMIT = 32 * 1024 * 1024              # safe scoped VMEM on v5e/v6e/v7x
LANE = 128


def _round_up(x, m):
    return ((x + m - 1) // m) * m


def _block_diag(blocks):
    rows = sum(b.shape[0] for b in blocks)
    cols = sum(b.shape[1] for b in blocks)
    out = jnp.zeros((rows, cols), blocks[0].dtype)
    r = c = 0
    for b in blocks:
        out = out.at[r:r + b.shape[0], c:c + b.shape[1]].set(b)
        r += b.shape[0]
        c += b.shape[1]
    return out


# ----------------------------- Pallas kernels -----------------------------

def _linear_kernel(x_ref, w_ref, b_ref, o_ref):
    acc = jnp.dot(x_ref[...], w_ref[...], preferred_element_type=jnp.float32)
    o_ref[...] = (acc + b_ref[...]).astype(o_ref.dtype)


def linear_pallas(x, w, b, *, tm_max=512):
    """y = x @ w + b.  bf16 MXU operands, f32 accumulation, row-tiled grid.
    Output columns are lane-padded to a multiple of 128 so the store is an
    unmasked, lane-dense vst; the wrapper slices the logical columns back out."""
    M, K = x.shape
    N = w.shape[1]
    Np = max(LANE, _round_up(N, LANE))
    wp = jnp.zeros((K, Np), jnp.bfloat16).at[:, :N].set(w.astype(jnp.bfloat16))
    bp = jnp.zeros((1, Np), jnp.float32).at[:, :N].set(
        b.reshape(1, N).astype(jnp.float32))

    tm = min(tm_max, _round_up(M, 8))
    Mp = pl.cdiv(M, tm) * tm
    xp = x.astype(jnp.bfloat16)
    if Mp != M:
        xp = jnp.pad(xp, ((0, Mp - M), (0, 0)))

    out = pl.pallas_call(
        _linear_kernel,
        out_shape=jax.ShapeDtypeStruct((Mp, Np), jnp.float32),
        grid=(Mp // tm,),
        in_specs=[
            pl.BlockSpec((tm, K), lambda i: (i, 0)),
            pl.BlockSpec((K, Np), lambda i: (0, 0)),
            pl.BlockSpec((1, Np), lambda i: (0, 0)),
        ],
        out_specs=pl.BlockSpec((tm, Np), lambda i: (i, 0)),
        compiler_params=pltpu.CompilerParams(
            dimension_semantics=("parallel",),
            vmem_limit_bytes=VMEM_LIMIT),
    )(xp, wp, bp)
    return out[:M, :N]


def _tail_kernel(q_ref, samp_ref, aw_ref, ab_ref, e_ref,
                 rw1_ref, w2_ref, dw1_ref, dw2_ref, ow_ref, ob_ref, o_ref,
                 *, nh, P):
    f32 = jnp.float32
    bf16 = jnp.bfloat16

    # fused attention_weights Linear
    logits = jnp.dot(q_ref[...], aw_ref[...], preferred_element_type=f32) + ab_ref[...]

    # softmax over the P sampling points, independently per head (2-D ops only)
    parts = []
    for h in range(nh):
        lg = logits[:, h * P:(h + 1) * P]
        lg = lg - jnp.max(lg, axis=-1, keepdims=True)
        ex = jnp.exp(lg)
        inv = pl.reciprocal(jnp.sum(ex, axis=-1, keepdims=True), approx=True)
        parts.append(ex * inv)
    attn = jnp.concatenate(parts, axis=-1)                       # (tm, nh*P)

    # broadcast per-(head, point) weights onto the flat (h, l, t, p, d) axis
    wfull = jnp.dot(attn.astype(bf16), e_ref[...], preferred_element_type=f32)
    weighted = samp_ref[...].astype(f32) * wfull                 # (tm, nh*L*T*P*D)

    # point-reduction matrix R is pre-folded into the first matching weight,
    # and eval-mode BN scales are pre-folded into every weight below.
    # per-level matching MLPs: Linear -> BN(eval) -> ReLU -> Linear -> BN -> ReLU
    # (block-diagonal over (head, level); heads share the per-level weights)
    h1 = jnp.maximum(jnp.dot(weighted.astype(bf16), rw1_ref[...],
                             preferred_element_type=f32), 0.0)
    h2 = jnp.maximum(jnp.dot(h1.astype(bf16), w2_ref[...],
                             preferred_element_type=f32), 0.0)
    # feature distillation MLP (block-diagonal over heads)
    h3 = jnp.maximum(jnp.dot(h2.astype(bf16), dw1_ref[...],
                             preferred_element_type=f32), 0.0)
    h4 = jnp.maximum(jnp.dot(h3.astype(bf16), dw2_ref[...],
                             preferred_element_type=f32), 0.0)

    # output projection (weights lane-padded to >=128 output channels)
    out = jnp.dot(h4.astype(bf16), ow_ref[...], preferred_element_type=f32) + ob_ref[...]
    o_ref[...] = out.astype(o_ref.dtype)


def fused_tail_pallas(q, samp, params, *, nh, L, T, P, D, tm_max=512):
    """Fused: attn logits -> softmax(points) -> weighted reduce -> matching MLPs
    -> distillation MLP -> output_proj.  q: (M, d_model); samp: (M, nh*L*T*P*D)."""
    M, d_model = q.shape
    f_in = nh * L * T * P * D
    f_mid = nh * L * T * D        # combined features, ordered (h, l, t, d)
    c2 = nh * L * D               # per-level matched features, ordered (h, l, d)
    assert samp.shape == (M, f_in)
    assert nh * D == d_model

    # constant routing matrices (tiny, built on host at trace time)
    E = np.zeros((nh * P, f_in), np.float32)
    R = np.zeros((f_in, f_mid), np.float32)
    for h in range(nh):
        for l in range(L):
            for t in range(T):
                g = (h * L + l) * T + t
                for p in range(P):
                    col = (g * P + p) * D
                    E[h * P + p, col:col + D] = 1.0
                    for d in range(D):
                        R[col + d, g * D + d] = 1.0
    E = jnp.asarray(E, jnp.bfloat16)
    R = jnp.asarray(R, jnp.float32)

    # block-diagonal matching / distillation weights (heads share the weights);
    # eval-mode BN scales folded in, point-reduction R folded into w1.
    w1b = _block_diag([params["match_w1"][l] for _ in range(nh) for l in range(L)])
    rw1 = (jnp.dot(R, w1b) * BN_SCALE).astype(jnp.bfloat16)           # (f_in, f_mid)
    w2b = (_block_diag([params["match_w2"][l] for _ in range(nh) for l in range(L)])
           * BN_SCALE).astype(jnp.bfloat16)                           # (f_mid, c2)
    dw1b = (_block_diag([params["dist_w1"]] * nh) * BN_SCALE).astype(jnp.bfloat16)
    dw2b = (_block_diag([params["dist_w2"]] * nh) * BN_SCALE).astype(jnp.bfloat16)

    aw = params["attn_w"].astype(jnp.bfloat16)
    ab = params["attn_b"].reshape(1, nh * P).astype(jnp.float32)

    # lane-dense output: pad output_proj to >=128 columns
    n_out = max(LANE, _round_up(d_model, LANE))
    ow = jnp.zeros((d_model, n_out), jnp.bfloat16).at[:, :d_model].set(
        params["output_proj_w"].astype(jnp.bfloat16))
    ob = jnp.zeros((1, n_out), jnp.float32).at[:, :d_model].set(
        params["output_proj_b"].reshape(1, d_model))

    tm = min(tm_max, _round_up(M, 8))
    Mp = pl.cdiv(M, tm) * tm
    qb = q.astype(jnp.bfloat16)
    sb = samp.astype(jnp.bfloat16)
    if Mp != M:
        qb = jnp.pad(qb, ((0, Mp - M), (0, 0)))
        sb = jnp.pad(sb, ((0, Mp - M), (0, 0)))

    kernel = functools.partial(_tail_kernel, nh=nh, P=P)
    out = pl.pallas_call(
        kernel,
        out_shape=jax.ShapeDtypeStruct((Mp, n_out), jnp.float32),
        grid=(Mp // tm,),
        in_specs=[
            pl.BlockSpec((tm, d_model), lambda i: (i, 0)),      # query
            pl.BlockSpec((tm, f_in), lambda i: (i, 0)),         # sampled features
            pl.BlockSpec((d_model, nh * P), lambda i: (0, 0)),  # attn_w
            pl.BlockSpec((1, nh * P), lambda i: (0, 0)),        # attn_b
            pl.BlockSpec((nh * P, f_in), lambda i: (0, 0)),     # E (expand weights)
            pl.BlockSpec((f_in, f_mid), lambda i: (0, 0)),      # R@matching_w1 (blkdiag)
            pl.BlockSpec((f_mid, c2), lambda i: (0, 0)),        # matching w2 (blkdiag)
            pl.BlockSpec((c2, c2), lambda i: (0, 0)),           # distill w1 (blkdiag)
            pl.BlockSpec((c2, d_model), lambda i: (0, 0)),      # distill w2 (blkdiag)
            pl.BlockSpec((d_model, n_out), lambda i: (0, 0)),   # output_proj w (padded)
            pl.BlockSpec((1, n_out), lambda i: (0, 0)),         # output_proj b (padded)
        ],
        out_specs=pl.BlockSpec((tm, n_out), lambda i: (i, 0)),
        compiler_params=pltpu.CompilerParams(
            dimension_semantics=("parallel",),
            vmem_limit_bytes=VMEM_LIMIT),
    )(qb, sb, aw, ab, E, rw1, w2b, dw1b, dw2b, ow, ob)
    return out[:M, :d_model]


# ------------------------------- parameters -------------------------------

def xavier_uniform(key, fan_in, fan_out):
    bound = math.sqrt(6.0 / (fan_in + fan_out))
    return jax.random.uniform(key, (fan_in, fan_out), jnp.float32, -bound, bound)


def kaiming_uniform(key, fan_in, fan_out):
    bound = math.sqrt(1.0 / fan_in)
    return jax.random.uniform(key, (fan_in, fan_out), jnp.float32, -bound, bound)


def init_params(key, d_model, num_heads, num_levels, num_points):
    dph = d_model // num_heads
    keys = jax.random.split(key, 4 + 2 * num_levels)
    p = {}
    # attention_weights: zero init (per _reset_parameters)
    p["attn_w"] = jnp.zeros((d_model, num_heads * num_points), jnp.float32)
    p["attn_b"] = jnp.zeros((num_heads * num_points,), jnp.float32)
    p["value_proj_w"] = xavier_uniform(keys[0], d_model, d_model)
    p["value_proj_b"] = jnp.zeros((d_model,), jnp.float32)
    p["output_proj_w"] = xavier_uniform(keys[1], d_model, d_model)
    p["output_proj_b"] = jnp.zeros((d_model,), jnp.float32)
    p["match_w1"] = [kaiming_uniform(keys[2 + 2 * l], 2 * dph, 2 * dph)
                     for l in range(num_levels)]
    p["match_w2"] = [kaiming_uniform(keys[3 + 2 * l], 2 * dph, dph)
                     for l in range(num_levels)]
    p["dist_w1"] = kaiming_uniform(keys[2 + 2 * num_levels],
                                   num_levels * dph, num_levels * dph)
    p["dist_w2"] = kaiming_uniform(keys[3 + 2 * num_levels],
                                   num_levels * dph, dph)
    return p


# ----------------------------- sampling (glue) -----------------------------

def bilinear_sample(value, spatial_shapes_list, num_cams, norm_loc):
    """value: (bs, num_value, nh, D);  norm_loc: (bs, Lq, nh, L, T, P, 2) in [0,1].
    Returns (bs, Lq, nh, L, T, P, D).  Zero padding outside, align_corners=False.
    All 4 bilinear taps and all cams are gathered with a single take_along_axis
    per level."""
    bs, Lq, nh, L, T, P, _ = norm_loc.shape
    D = value.shape[-1]
    outs = []
    offset = 0
    for lvl, (TH, W) in enumerate(spatial_shapes_list):
        Hgt = TH // num_cams
        n = TH * W
        v_l = value[:, offset:offset + n]                       # (bs, T*Hgt*W, nh, D)
        offset += n
        v_l = v_l.reshape(bs, T, Hgt * W, nh, D)
        v_l = jnp.transpose(v_l, (0, 1, 3, 2, 4)).reshape(bs, T * nh, Hgt * W, D)

        loc = norm_loc[:, :, :, lvl]                            # (bs, Lq, nh, T, P, 2)
        x = loc[..., 0] * W - 0.5
        y = loc[..., 1] * Hgt - 0.5
        x0 = jnp.floor(x)
        y0 = jnp.floor(y)
        lx = x - x0
        ly = y - y0
        x0i = x0.astype(jnp.int32)
        y0i = y0.astype(jnp.int32)

        taps_idx, taps_w = [], []
        for dy in (0, 1):
            for dx in (0, 1):
                xi = x0i + dx
                yi = y0i + dy
                valid = (xi >= 0) & (xi < W) & (yi >= 0) & (yi < Hgt)
                xi_c = jnp.clip(xi, 0, W - 1)
                yi_c = jnp.clip(yi, 0, Hgt - 1)
                taps_idx.append(yi_c * W + xi_c)
                wx = lx if dx == 1 else (1.0 - lx)
                wy = ly if dy == 1 else (1.0 - ly)
                taps_w.append(wx * wy * valid.astype(value.dtype))
        idx = jnp.stack(taps_idx, axis=-1)                      # (bs, Lq, nh, T, P, 4)
        wts = jnp.stack(taps_w, axis=-1)                        # (bs, Lq, nh, T, P, 4)

        idx_t = jnp.transpose(idx, (0, 3, 2, 1, 4, 5)).reshape(bs, T * nh, Lq * P * 4)
        g = jnp.take_along_axis(v_l, idx_t[..., None], axis=2)  # (bs, T*nh, Lq*P*4, D)
        g = g.reshape(bs, T, nh, Lq, P, 4, D)
        wts_t = jnp.transpose(wts, (0, 3, 2, 1, 4, 5))          # (bs, T, nh, Lq, P, 4)
        samp = jnp.sum(g * wts_t[..., None], axis=5)            # (bs, T, nh, Lq, P, D)
        samp = jnp.transpose(samp, (0, 3, 2, 1, 4, 5))          # (bs, Lq, nh, T, P, D)
        outs.append(samp)
    return jnp.stack(outs, axis=3)                              # (bs, Lq, nh, L, T, P, D)


# -------------------------------- forward ---------------------------------

def mv_deform_attn_forward(params, cfg, query, key, value, spatial_shapes,
                           sampling_locations):
    d_model = cfg["d_model"]
    num_heads = cfg["num_heads"]
    num_levels = cfg["num_levels"]
    num_cams = cfg["num_cams"]
    num_points = cfg["num_points"]
    dph = d_model // num_heads
    assert num_cams == 2, "matching_layer expects concatenated features of 2 cams"

    if value is None:
        value = key
    bs, num_query, _ = query.shape
    _, num_value, _ = value.shape
    spatial_shapes_list = [(int(h), int(w)) for h, w in spatial_shapes]
    assert sum(h * w for h, w in spatial_shapes_list) == num_value

    # value projection (Pallas tiled matmul, lane-dense output)
    v = linear_pallas(value.reshape(bs * num_value, d_model),
                      params["value_proj_w"], params["value_proj_b"])
    v = v.reshape(bs, num_value, num_heads, dph)

    # normalize sampling locations by per-view (W, H)
    ss = jnp.asarray(spatial_shapes, jnp.int32)
    view_ss = jnp.flip(ss, axis=-1)
    view_ss = view_ss.at[:, 1].set(view_ss[:, 1] // num_cams)   # (L, 2): (W, H)
    norm_loc = sampling_locations / view_ss[None, None, None, :, None, None, :].astype(
        sampling_locations.dtype)

    # bilinear sampling (data-dependent gather, XLA glue)
    sampled = bilinear_sample(v, spatial_shapes_list, num_cams, norm_loc)
    # natural (h, l, t, p, d) flatten per query row, no transpose of the big tensor
    samp_flat = sampled.reshape(
        bs * num_query, num_heads * num_levels * num_cams * num_points * dph)

    # fused tail: attn softmax -> weighted reduce -> matching -> distillation -> proj
    out = fused_tail_pallas(query.reshape(bs * num_query, d_model), samp_flat, params,
                            nh=num_heads, L=num_levels, T=num_cams,
                            P=num_points, D=dph)
    return out.reshape(bs, num_query, d_model)


# ---------------------------------- main -----------------------------------

if __name__ == "__main__":
    d_model, num_heads, num_levels, num_cams, num_points = 32, 4, 2, 2, 4
    bs, num_query = 2, 8
    cfg = dict(d_model=d_model, num_heads=num_heads, num_levels=num_levels,
               num_cams=num_cams, num_points=num_points)

    # spatial_shapes rows are (num_cams * H, W) per level
    spatial_shapes = jnp.array([[num_cams * 4, 8], [num_cams * 2, 4]], jnp.int32)
    num_value = int(jnp.sum(spatial_shapes[:, 0] * spatial_shapes[:, 1]))

    key0 = jax.random.PRNGKey(0)
    k_param, k_q, k_k, k_loc = jax.random.split(key0, 4)
    params = init_params(k_param, d_model, num_heads, num_levels, num_points)

    query = jax.random.normal(k_q, (bs, num_query, d_model), jnp.float32)
    keyv = jax.random.normal(k_k, (bs, num_value, d_model), jnp.float32)

    # sampling locations in absolute per-view pixel coords (x in [0, W), y in [0, H))
    view_wh = jnp.stack([spatial_shapes[:, 1],
                         spatial_shapes[:, 0] // num_cams], axis=-1).astype(jnp.float32)
    unit = jax.random.uniform(
        k_loc, (bs, num_query, num_heads, num_levels, num_cams, num_points, 2),
        jnp.float32)
    sampling_locations = unit * view_wh[None, None, None, :, None, None, :]

    out = mv_deform_attn_forward(params, cfg, query, keyv, None,
                                 spatial_shapes, sampling_locations)
    out = jax.block_until_ready(out)
    assert out.shape == (bs, num_query, d_model)
    assert bool(jnp.all(jnp.isfinite(out)))
    print("KERNEL_OK")
</pallas_src>

<mosaic_0001>
module attributes {stable_mosaic.version = 11 : i64} {
  func.func @_linear_kernel(%arg0: i32, %arg1: memref<160x32xbf16, #tpu.memory_space<vmem>>, %arg2: memref<32x128xbf16, #tpu.memory_space<vmem>>, %arg3: memref<1x128xf32, #tpu.memory_space<vmem>>, %arg4: memref<160x128xf32, #tpu.memory_space<vmem>>) attributes {dimension_semantics = [#tpu.dimension_semantics<parallel>], iteration_bounds = array<i64: 1>, scalar_prefetch = 0 : i64, scratch_operands = 0 : i64, tpu.core_type = #tpu.core_type<tc>, window_params = [{transform_indices = @transform_0, window_bounds = array<i64: 160, 32>}, {pipeline_mode = #tpu.pipeline_mode<synchronous>, transform_indices = @transform_1, window_bounds = array<i64: 32, 128>}, {pipeline_mode = #tpu.pipeline_mode<synchronous>, transform_indices = @transform_2, window_bounds = array<i64: 1, 128>}, {transform_indices = @transform_3, window_bounds = array<i64: 160, 128>}]} {
    %c0 = arith.constant 0 : index
    %c0_0 = arith.constant 0 : index
    %0 = vector.load %arg1[%c0, %c0_0] : memref<160x32xbf16, #tpu.memory_space<vmem>>, vector<160x32xbf16>
    %c0_1 = arith.constant 0 : index
    %c0_2 = arith.constant 0 : index
    %1 = vector.load %arg2[%c0_1, %c0_2] : memref<32x128xbf16, #tpu.memory_space<vmem>>, vector<32x128xbf16>
    %cst = arith.constant dense<0.000000e+00> : vector<160x128xf32>
    %2 = tpu.matmul %0, %1, %cst {dimension_numbers = #tpu.dot_dimension_numbers<[1], [0], [0], [1], [0, 0, 1, 1], [], []>} : vector<160x32xbf16>, vector<32x128xbf16>, vector<160x128xf32> -> vector<160x128xf32>
    %c0_3 = arith.constant 0 : index
    %c0_4 = arith.constant 0 : index
    %3 = vector.load %arg3[%c0_3, %c0_4] : memref<1x128xf32, #tpu.memory_space<vmem>>, vector<1x128xf32>
    %4 = vector.broadcast %3 : vector<1x128xf32> to vector<160x128xf32>
    %5 = arith.addf %2, %4 : vector<160x128xf32>
    %c0_5 = arith.constant 0 : index
    %c0_6 = arith.constant 0 : index
    %6 = vector.load %arg4[%c0_5, %c0_6] : memref<160x128xf32, #tpu.memory_space<vmem>>, vector<160x128xf32>
    tpu.vector_store %arg4[%c0_5, %c0_6], %5 {strides = array<i32>} : memref<160x128xf32, #tpu.memory_space<vmem>>, vector<160x128xf32>,
    return
  }
  func.func @transform_0(%arg0: i32) -> (i32, i32) {
    %c0_i32 = arith.constant 0 : i32
    %c0_i32_0 = arith.constant 0 : i32
    return %arg0, %c0_i32 : i32, i32
  }
  func.func @transform_1(%arg0: i32) -> (i32, i32) {
    %c0_i32 = arith.constant 0 : i32
    %c0_i32_0 = arith.constant 0 : i32
    %c0_i32_1 = arith.constant 0 : i32
    return %c0_i32, %c0_i32_0 : i32, i32
  }
  func.func @transform_2(%arg0: i32) -> (i32, i32) {
    %c0_i32 = arith.constant 0 : i32
    %c0_i32_0 = arith.constant 0 : i32
    %c0_i32_1 = arith.constant 0 : i32
    return %c0_i32, %c0_i32_0 : i32, i32
  }
  func.func @transform_3(%arg0: i32) -> (i32, i32) {
    %c0_i32 = arith.constant 0 : i32
    %c0_i32_0 = arith.constant 0 : i32
    return %arg0, %c0_i32 : i32, i32
  }
}

</mosaic_0001>

<llo_original>
// kernel: tpu_custom_call.1
$region0: #{tpu_custom_call.1}
  #allocation0 [shape = 'u32[]', space=smem, size = 0x4, offset = 0x4, fixed_abs, tag = 'smem constant byte address 0x4 - core index']
  #allocation1 [shape = 'u32[144,128]{1,0:T(1,128)}', space=vmem, size = 0x12000, scoped, tag = 'internal scratch']
  %s0 = inlined_call_operand.vmem [shape: bf16[160,32], index: 0, kind: input, shape index: {}]
  %s1 = inlined_call_operand.vmem [shape: bf16[32,128], index: 1, kind: input, shape index: {}]
  %s2 = inlined_call_operand.vmem [shape: f32[1,128], index: 2, kind: input, shape index: {}]
  %s3 = inlined_call_operand.hbm [shape: f32[160,128], index: 3, kind: output, shape index: {}]
  %s4 = sld [smem:[#allocation0]]
  $region22: #{tpu_custom_call.1} parent=0
    _
  %s6 = ssub.s32 1, %s4
  %s7 = scalar_select 0, %s6, %s4
  $region1: #{tpu_custom_call.1} parent=0
    #allocation2 [shape = 'u8[81920]{0}', space=vmem, size = 0x14000, scoped, tag = 'output window, operand 0, single buffered']
    #allocation3 [shape = 's32[1]{0}', space=sflag, size = 0x4, scoped, tag = 'scoped memory for tpu_custom_call.1']
    %8 = vsyncpa [#allocation3], 0
    // Predicated region
    $region2: #{tpu_custom_call.1} parent=1 // pred_check
      _
    $region3: #{tpu_custom_call.1} parent=1 // pred_check_branch
      %10 = sbr.rel (0) target = $region5
    $region4: #{tpu_custom_call.1} parent=1 // pred_region
      _
    $region5: #{tpu_custom_call.1} parent=1 // pred_fallthru
      _
    // Predicated region
    $region6: #{tpu_custom_call.1} parent=1 // pred_check
      _
    $region7: #{tpu_custom_call.1} parent=1 // pred_check_branch
      %12 = sbr.rel (0) target = $region9
    $region8: #{tpu_custom_call.1} parent=1 // pred_region
      _
    $region9: #{tpu_custom_call.1} parent=1 // pred_fallthru
      _
    // Predicated region
    $region10: #{tpu_custom_call.1} parent=1 // pred_check
      _
    $region11: #{tpu_custom_call.1} parent=1 // pred_check_branch
      %14 = sbr.rel (0) target = $region13
    $region12: #{tpu_custom_call.1} parent=1 // pred_region
      _
    $region13: #{tpu_custom_call.1} parent=1 // pred_fallthru
      _
    %v16 = vld [vmem:[%s0] sm:$0xf]
    %v17 = vld [vmem:[%s0 + $0x4] sm:$0xf]
    %v18 = vld [vmem:[%s0 + $0x8] sm:$0xf]
    %v19 = vld [vmem:[%s0 + $0xc] sm:$0xf]
    %v20 = vld [vmem:[%s0 + $0x10] sm:$0xf]
    %v21 = vld [vmem:[%s0 + $0x14] sm:$0xf]
    %v22 = vld [vmem:[%s0 + $0x18] sm:$0xf]
    %v23 = vld [vmem:[%s0 + $0x1c] sm:$0xf]
    %v24 = vld [vmem:[%s0 + $0x20] sm:$0xf]
    %v25 = vld [vmem:[%s0 + $0x24] sm:$0xf]
    %v26 = vld [vmem:[%s0 + $0x28] sm:$0xf]
    %v27 = vld [vmem:[%s0 + $0x2c] sm:$0xf]
    %v28 = vld [vmem:[%s0 + $0x30] sm:$0xf]
    %v29 = vld [vmem:[%s0 + $0x34] sm:$0xf]
    %v30 = vld [vmem:[%s0 + $0x38] sm:$0xf]
    %v31 = vld [vmem:[%s0 + $0x3c] sm:$0xf]
    %v32 = vld [vmem:[%s0 + $0x40] sm:$0xf]
    %v33 = vld [vmem:[%s0 + $0x44] sm:$0xf]
    %v34 = vld [vmem:[%s0 + $0x48] sm:$0xf]
    %v35 = vld [vmem:[%s0 + $0x4c] sm:$0xf]
    %v36 = vld [vmem:[%s1] sm:$0xf]
    %v37 = vld [vmem:[%s1 + $0x4] sm:$0xf]
    %v38 = vld [vmem:[%s1 + $0x8] sm:$0xf]
    %v39 = vld [vmem:[%s1 + $0xc] sm:$0xf]
    %v40 = vld [vmem:[%s2] sm:$0x1]
    %v42 = vlaneseq
    %v43 = vshrl.u32 %v42, 7
    %v44 = vsub.s32 0, %v43
    %v45 = vrot.slane %v40, %v44
    %v67 = vunpack.c.l.b16 %v16
    %v68 = vunpack.c.l.b16 %v17
    %v69 = vunpack.c.l.b16 %v18
    %v70 = vunpack.c.l.b16 %v19
    %v71 = vunpack.c.l.b16 %v20
    %v72 = vunpack.c.l.b16 %v21
    %v73 = vunpack.c.l.b16 %v22
    %v74 = vunpack.c.l.b16 %v23
    %v75 = vunpack.c.l.b16 %v24
    %v76 = vunpack.c.l.b16 %v25
    %v77 = vunpack.c.l.b16 %v26
    %v78 = vunpack.c.l.b16 %v27
    %v79 = vunpack.c.l.b16 %v28
    %v80 = vunpack.c.l.b16 %v29
    %v81 = vunpack.c.l.b16 %v30
    %v82 = vunpack.c.l.b16 %v31
    %v83 = vunpack.c.l.b16 %v32
    %v84 = vunpack.c.l.b16 %v33
    %v85 = vunpack.c.l.b16 %v34
    %v86 = vunpack.c.l.b16 %v35
    %v87 = vpack.c.b16 %v68, %v67
    %v88 = vpack.c.b16 %v70, %v69
    %v89 = vpack.c.b16 %v72, %v71
    %v90 = vpack.c.b16 %v74, %v73
    %v91 = vpack.c.b16 %v76, %v75
    %v92 = vpack.c.b16 %v78, %v77
    %v93 = vpack.c.b16 %v80, %v79
    %v94 = vpack.c.b16 %v82, %v81
    %v95 = vpack.c.b16 %v84, %v83
    %v96 = vpack.c.b16 %v86, %v85
    %v101 = vunpack.c.l.b16 %v36
    %v102 = vunpack.c.l.b16 %v37
    %v103 = vunpack.c.l.b16 %v38
    %v104 = vunpack.c.l.b16 %v39
    %v105 = vpack.c.b16 %v102, %v101
    %v106 = vpack.c.b16 %v104, %v103
    %vm109 = vcmask 261120
    %v111 = vsel %vm109, %v87, 0
    %v114 = vsel %vm109, %v88, 0
    %v117 = vsel %vm109, %v89, 0
    %v120 = vsel %vm109, %v90, 0
    %v123 = vsel %vm109, %v91, 0
    %v126 = vsel %vm109, %v92, 0
    %v129 = vsel %vm109, %v93, 0
    %v132 = vsel %vm109, %v94, 0
    %v135 = vsel %vm109, %v95, 0
    %v138 = vsel %vm109, %v96, 0
    %140 = vmatprep.subr.bf16.mxu0 0
    %141 = vmatpush1.bf16.msra.mxu0 %v105
    %142 = vmatprep.subr.bf16.mxu0 0
    %143 = vmatpush1.bf16.msra.mxu0 %v106
    %144 = vmatprep.subr.bf16.mxu0 0
    %145 = vmatpush1.bf16.msra.mxu0 0
    %146 = vmatprep.subr.bf16.mxu0 0
    %147 = vmatpush1.bf16.msra.mxu0 0
    %148 = vmatprep.subr.bf16.mxu0 0
    %149 = vmatpush1.bf16.msra.mxu0 0
    %150 = vmatprep.subr.bf16.mxu0 0
    %151 = vmatpush1.bf16.msra.mxu0 0
    %152 = vmatprep.subr.bf16.mxu0 0
    %153 = vmatpush1.bf16.msra.mxu0 0
    %154 = vmatprep.subr.bf16.mxu0 0
    %155 = vmatpush1.bf16.msra.mxu0 0
    %156 = vmatprep.subr.bf16.mxu0 0
    %157 = vmatpush1.bf16.msra.mxu0 0
    %158 = vmatprep.subr.bf16.mxu0 0
    %159 = vmatpush1.bf16.msra.mxu0 0
    %160 = vmatprep.subr.bf16.mxu0 0
    %161 = vmatpush1.bf16.msra.mxu0 0
    %162 = vmatprep.subr.bf16.mxu0 0
    %163 = vmatpush1.bf16.msra.mxu0 0
    %164 = vmatprep.subr.bf16.mxu0 0
    %165 = vmatpush1.bf16.msra.mxu0 0
    %166 = vmatprep.subr.bf16.mxu0 0
    %167 = vmatpush1.bf16.msra.mxu0 0
    %168 = vmatprep.subr.bf16.mxu0 0
    %169 = vmatpush1.bf16.msra.mxu0 0
    %170 = vmatprep.subr.bf16.mxu0 0
    %171 = vmatpush1.bf16.msra.mxu0 0
    %172 = vmatprep.mubr.bf16.mxu0 0
    %173 = vmatmul.mubr.bf16.gmra.mrb[0].mxu0 %v111
    %v174 = vpop.f32.mrb[0].mxu0
    %v175 = vadd.f32 %v45, %v174
    %v176 = vpop.f32.mrb[0].mxu0
    %v177 = vpop.f32.mrb[0].mxu0
    %v178 = vadd.f32 %v45, %v177
    %v179 = vpop.f32.mrb[0].mxu0
    %180 = vmatprep.mubr.bf16.mxu0 0
    %181 = vmatmul.mubr.bf16.gmra.mrb[0].mxu0 %v114
    %v182 = vpop.f32.mrb[0].mxu0
    %v183 = vadd.f32 %v45, %v182
    %v184 = vpop.f32.mrb[0].mxu0
    %v185 = vpop.f32.mrb[0].mxu0
    %v186 = vadd.f32 %v45, %v185
    %v187 = vpop.f32.mrb[0].mxu0
    %188 = vmatprep.mubr.bf16.mxu0 0
    %189 = vmatmul.mubr.bf16.gmra.mrb[0].mxu0 %v117
    %v190 = vpop.f32.mrb[0].mxu0
    %v191 = vadd.f32 %v45, %v190
    %v192 = vpop.f32.mrb[0].mxu0
    %v193 = vpop.f32.mrb[0].mxu0
    %v194 = vadd.f32 %v45, %v193
    %v195 = vpop.f32.mrb[0].mxu0
    %196 = vmatprep.mubr.bf16.mxu0 0
    %197 = vmatmul.mubr.bf16.gmra.mrb[0].mxu0 %v120
    %v198 = vpop.f32.mrb[0].mxu0
    %v199 = vadd.f32 %v45, %v198
    %v200 = vpop.f32.mrb[0].mxu0
    %v201 = vpop.f32.mrb[0].mxu0
    %v202 = vadd.f32 %v45, %v201
    %v203 = vpop.f32.mrb[0].mxu0
    %204 = vmatprep.mubr.bf16.mxu0 0
    %205 = vmatmul.mubr.bf16.gmra.mrb[0].mxu0 %v123
    %v206 = vpop.f32.mrb[0].mxu0
    %v207 = vadd.f32 %v45, %v206
    %v208 = vpop.f32.mrb[0].mxu0
    %v209 = vpop.f32.mrb[0].mxu0
    %v210 = vadd.f32 %v45, %v209
    %v211 = vpop.f32.mrb[0].mxu0
    %212 = vmatprep.mubr.bf16.mxu0 0
    %213 = vmatmul.mubr.bf16.gmra.mrb[0].mxu0 %v126
    %v214 = vpop.f32.mrb[0].mxu0
    %v215 = vadd.f32 %v45, %v214
    %v216 = vpop.f32.mrb[0].mxu0
    %v217 = vpop.f32.mrb[0].mxu0
    %v218 = vadd.f32 %v45, %v217
    %v219 = vpop.f32.mrb[0].mxu0
    %220 = vmatprep.mubr.bf16.mxu0 0
    %221 = vmatmul.mubr.bf16.gmra.mrb[0].mxu0 %v129
    %v222 = vpop.f32.mrb[0].mxu0
    %v223 = vadd.f32 %v45, %v222
    %v224 = vpop.f32.mrb[0].mxu0
    %v225 = vpop.f32.mrb[0].mxu0
    %v226 = vadd.f32 %v45, %v225
    %v227 = vpop.f32.mrb[0].mxu0
    %228 = vmatprep.mubr.bf16.mxu0 0
    %229 = vmatmul.mubr.bf16.gmra.mrb[0].mxu0 %v132
    %v230 = vpop.f32.mrb[0].mxu0
    %v231 = vadd.f32 %v45, %v230
    %v232 = vpop.f32.mrb[0].mxu0
    %v233 = vpop.f32.mrb[0].mxu0
    %v234 = vadd.f32 %v45, %v233
    %v235 = vpop.f32.mrb[0].mxu0
    %236 = vmatprep.mubr.bf16.mxu0 0
    %237 = vmatmul.mubr.bf16.gmra.mrb[0].mxu0 %v135
    %v238 = vpop.f32.mrb[0].mxu0
    %v239 = vadd.f32 %v45, %v238
    %v240 = vpop.f32.mrb[0].mxu0
    %v241 = vpop.f32.mrb[0].mxu0
    %v242 = vadd.f32 %v45, %v241
    %v243 = vpop.f32.mrb[0].mxu0
    %244 = vmatprep.mubr.bf16.mxu0 0
    %245 = vmatmul.mubr.bf16.gmra.mrb[0].mxu0 %v138
    %v246 = vpop.f32.mrb[0].mxu0
    %v247 = vadd.f32 %v45, %v246
    %v248 = vpop.f32.mrb[0].mxu0
    %v249 = vpop.f32.mrb[0].mxu0
    %v250 = vadd.f32 %v45, %v249
    %v251 = vpop.f32.mrb[0].mxu0
    %252 = vdwg.mxu0
    %253 = vst [vmem:[#allocation2] sm:$0xff] %v175
    %254 = vst [vmem:[#allocation2 + $0x8] sm:$0xff] %v178
    %255 = vst [vmem:[#allocation2 + $0x10] sm:$0xff] %v183
    %256 = vst [vmem:[#allocation2 + $0x18] sm:$0xff] %v186
    %257 = vst [vmem:[#allocation2 + $0x20] sm:$0xff] %v191
    %258 = vst [vmem:[#allocation2 + $0x28] sm:$0xff] %v194
    %259 = vst [vmem:[#allocation2 + $0x30] sm:$0xff] %v199
    %260 = vst [vmem:[#allocation2 + $0x38] sm:$0xff] %v202
    %261 = vst [vmem:[#allocation2 + $0x40] sm:$0xff] %v207
    %262 = vst [vmem:[#allocation2 + $0x48] sm:$0xff] %v210
    %263 = vst [vmem:[#allocation2 + $0x50] sm:$0xff] %v215
    %264 = vst [vmem:[#allocation2 + $0x58] sm:$0xff] %v218
    %265 = vst [vmem:[#allocation2 + $0x60] sm:$0xff] %v223
    %266 = vst [vmem:[#allocation2 + $0x68] sm:$0xff] %v226
    %267 = vst [vmem:[#allocation2 + $0x70] sm:$0xff] %v231
    %268 = vst [vmem:[#allocation2 + $0x78] sm:$0xff] %v234
    %269 = vst [vmem:[#allocation2 + $0x80] sm:$0xff] %v239
    %270 = vst [vmem:[#allocation2 + $0x88] sm:$0xff] %v242
    %271 = vst [vmem:[#allocation2 + $0x90] sm:$0xff] %v247
    %272 = vst [vmem:[#allocation2 + $0x98] sm:$0xff] %v250
    // Predicated region
    $region14: #{tpu_custom_call.1} parent=1 // pred_check
      _
    $region15: #{tpu_custom_call.1} parent=1 // pred_check_branch
      %274 = sbr.rel (0) target = $region17
    $region16: #{tpu_custom_call.1} parent=1 // pred_region
      %s276 = ssub.s32 2560, 2560
      %277 = vsyncadd [#allocation3], %s276
      %s278 = sshll.u32 [#allocation2], 4
      %s279 = int_to_ptr.vmem [resolvable:$true] %s278
      %284 = dma.vmem_to_hbm [thread:$0]  %s279, 2560, %s3, [#allocation3], 128, 128, 8
    $region17: #{tpu_custom_call.1} parent=1 // pred_fallthru
      _
    // Predicated region
    $region18: #{tpu_custom_call.1} parent=1 // pred_check
      _
    $region19: #{tpu_custom_call.1} parent=1 // pred_check_branch
      %286 = sbr.rel (0) target = $region21
    $region20: #{tpu_custom_call.1} parent=1 // pred_region
      %287 = dma.done [#allocation3], 2560
    $region21: #{tpu_custom_call.1} parent=1 // pred_fallthru
      _
    %288 = vsyncpa [#allocation3], 1

</llo_original>
